<compile_context>
chip_gen: v7x
topology: tpu7x:2x2x1
jax: 0.10.0
libtpu: 0.0.40
codegen_flags: <defaults>
</compile_context>

<pallas_src>
import math
from typing import Dict

import jax
import jax.numpy as jnp
from jax.experimental import pallas as pl
from jax.experimental.pallas import tpu as pltpu


def _round_up(x: int, m: int) -> int:
    return ((x + m - 1) // m) * m


def _pick_batch_tile(B: int) -> int:
    """Batch tile: multiple of 16 (bf16 sublane packing), minimal dead rows."""
    if B <= 512:
        return _round_up(B, 16)
    best_tb, best_waste = 128, None
    for cand in (512, 448, 384, 320, 256, 192, 128):  # all multiples of 16
        waste = _round_up(B, cand) - B
        if best_waste is None or waste < best_waste:
            best_tb, best_waste = cand, waste
    return best_tb


def _pick_n_tile(Np: int) -> int:
    """N tile: whole (padded) N if small, else largest divisor <= 1024."""
    if Np <= 1024:
        return Np
    for cand in (1024, 896, 768, 640, 512, 384, 256, 128):
        if Np % cand == 0:
            return cand
    return 128


# ------------------------------ fused kernel ------------------------------- #
def cat_encoder_forward(x: jax.Array, table: jax.Array, w_t: jax.Array, b: jax.Array,
                        *, embedding_dim: int, out_dtype=jnp.float32) -> jax.Array:
    """relu(flatten(embed(x)) @ w_t + b), fully fused in one Pallas kernel.

    x:     (B, C)        int32 column-local category indices
    table: (C, Vmax, D)  bf16 per-column embedding tables (rows zero-padded to Vmax)
    w_t:   (C*D, N)      bf16 fc1 weight, pre-transposed to (in, out)
    b:     (N,)          f32 fc1 bias
    """
    B, C = x.shape
    Ct, Vmax, D = table.shape
    K, N = w_t.shape
    assert Ct == C and D == embedding_dim and K == C * D and b.shape == (N,)

    # ---- tile / padding selection (lane-dense stores, minimal dead work) ----
    Np = _round_up(N, 128)
    tn = _pick_n_tile(Np)
    tb = _pick_batch_tile(B)
    Bp = _round_up(B, tb)

    x_p = x if Bp == B else jnp.pad(x, ((0, Bp - B), (0, 0)))
    w_p = w_t if Np == N else jnp.pad(w_t, ((0, 0), (0, Np - N)))
    b_p = b.reshape(1, N)
    if Np != N:
        b_p = jnp.pad(b_p, ((0, 0), (0, Np - N)))

    # Grid: j (N tiles) OUTER, i (batch tiles) INNER -> weight/bias block index
    # (0, j) is constant across the inner loop, so it stays VMEM-resident and is
    # DMA'd only once per N column instead of once per batch tile.
    grid = (Np // tn, Bp // tb)

    def kernel(idx_ref, tab_ref, w_ref, b_ref, o_ref):
        # idx_ref: (tb, C) i32   tab_ref: (C, Vmax, D) bf16
        # w_ref:   (K, tn) bf16  b_ref: (1, tn) f32     o_ref: (tb, tn) out_dtype
        tb_, tn_ = o_ref.shape
        acc = jnp.zeros((tb_, tn_), jnp.float32)
        vocab_iota = jax.lax.broadcasted_iota(jnp.int32, (tb_, Vmax), 1)  # hoisted
        for c in range(C):  # static unroll over categorical columns (C is small)
            col_idx = idx_ref[:, c:c + 1]                               # (tb, 1)
            onehot = (vocab_iota == col_idx).astype(tab_ref.dtype)      # (tb, Vmax) bf16
            emb = jnp.dot(onehot, tab_ref[c],
                          preferred_element_type=jnp.float32)           # (tb, D) f32, exact
            w_c = w_ref[c * D:(c + 1) * D, :]                           # (D, tn) bf16
            acc = acc + jnp.dot(emb.astype(w_ref.dtype), w_c,
                                preferred_element_type=jnp.float32)     # (tb, tn) f32
        o_ref[...] = jnp.maximum(acc + b_ref[...], 0.0).astype(o_ref.dtype)

    # VMEM budget derived from actual tile usage (double-buffered BlockSpec tiles
    # plus in-kernel temporaries), floored at 16 MiB, capped at 64 MiB so the same
    # configuration stays inside v7x's physical VMEM.
    tile_bytes = 2 * (tb * C * 4            # idx tile (i32)
                      + C * Vmax * D * 2    # embedding table (bf16)
                      + K * tn * 2          # weight tile (bf16)
                      + tn * 4              # bias tile (f32)
                      + tb * tn * 4)        # output tile (<= f32)
    temp_bytes = tb * tn * 4 + tb * Vmax * 6 + tb * D * 4
    vmem_limit = int(min(64 * 1024 * 1024,
                         max(16 * 1024 * 1024, 2 * (tile_bytes + temp_bytes))))

    out = pl.pallas_call(
        kernel,
        out_shape=jax.ShapeDtypeStruct((Bp, Np), out_dtype),
        grid_spec=pltpu.PrefetchScalarGridSpec(
            num_scalar_prefetch=0,
            grid=grid,
            in_specs=[
                pl.BlockSpec((tb, C), lambda j, i: (i, 0)),            # indices
                pl.BlockSpec((C, Vmax, D), lambda j, i: (0, 0, 0)),    # emb table (resident)
                pl.BlockSpec((K, tn), lambda j, i: (0, j)),            # weight   (resident per j)
                pl.BlockSpec((1, tn), lambda j, i: (0, j)),            # bias     (resident per j)
            ],
            out_specs=pl.BlockSpec((tb, tn), lambda j, i: (i, j)),
        ),
        compiler_params=pltpu.CompilerParams(
            # Both axes independent -> shardable across TensorCores (v7x megacore).
            dimension_semantics=("parallel", "parallel"),
            vmem_limit_bytes=vmem_limit,
        ),
    )(x_p, table, w_p, b_p)
    return out[:B, :N]


# ------------------------------ CatEncoder --------------------------------- #
class CatEncoderPallas:
    """JAX/Pallas re-implementation of CatEncoder's forward pass."""

    def __init__(self, vocabulary: Dict[str, Dict[str, int]], embedding_dim: int, key):
        self.vocabulary = vocabulary
        self.embedding_dim = embedding_dim
        self.columns = list(vocabulary.keys())
        C = len(self.columns)
        hidden = embedding_dim * C

        vocab_sizes = [len(vocabulary[c]) for c in self.columns]
        vmax = max(8, _round_up(max(vocab_sizes), 8))  # sublane-aligned row count

        keys = jax.random.split(key, C + 2)
        # Per-column embedding tables (nn.Embedding default ~ N(0,1)), row-padded
        # to a common Vmax and stacked -> (C, Vmax, D).
        tabs = []
        for i, vs in enumerate(vocab_sizes):
            t = jax.random.normal(keys[i], (vs, embedding_dim), dtype=jnp.float32)
            tabs.append(jnp.pad(t, ((0, vmax - vs), (0, 0))))
        self.table_f32 = jnp.stack(tabs, axis=0)                 # reference copy
        self.table_bf16 = self.table_f32.astype(jnp.bfloat16)    # kernel operand (cast once)

        # nn.Linear(hidden, hidden): W (out,in), b (out,) ~ U(-1/sqrt(in), 1/sqrt(in))
        bound = 1.0 / math.sqrt(hidden)
        self.W = jax.random.uniform(keys[-2], (hidden, hidden),
                                    minval=-bound, maxval=bound, dtype=jnp.float32)
        self.b = jax.random.uniform(keys[-1], (hidden,),
                                    minval=-bound, maxval=bound, dtype=jnp.float32)
        # Pre-transposed to (in, out) and pre-cast to bf16 once, off the hot path.
        self.W_t_bf16 = self.W.T.astype(jnp.bfloat16)

    def __call__(self, x: jax.Array) -> jax.Array:
        # x: (B, C) int32 column-local category indices.
        return cat_encoder_forward(x, self.table_bf16, self.W_t_bf16, self.b,
                                   embedding_dim=self.embedding_dim,
                                   out_dtype=jnp.float32)

    def reference(self, x: jax.Array) -> jax.Array:
        # Pure-f32 reference matching the PyTorch module's math.
        B, C = x.shape
        cols = jnp.arange(C)
        h = self.table_f32[cols[None, :], x].reshape(B, -1)      # (B, C*D)
        return jnp.maximum(h @ self.W.T + self.b, 0.0)


# --------------------------------- main ------------------------------------ #
if __name__ == "__main__":
    key = jax.random.PRNGKey(0)
    k_params, k_data = jax.random.split(key)

    # Small synthetic vocabulary: 4 categorical columns.
    vocabulary = {
        "col_a": {f"a{i}": i for i in range(10)},
        "col_b": {f"b{i}": i for i in range(7)},
        "col_c": {f"c{i}": i for i in range(5)},
        "col_d": {f"d{i}": i for i in range(12)},
    }
    embedding_dim = 32           # hidden = 4 * 32 = 128 (lane-aligned)
    batch = 8

    enc = CatEncoderPallas(vocabulary, embedding_dim, k_params)

    # Deterministic integer inputs, per-column valid index ranges.
    sizes = jnp.array([len(vocabulary[c]) for c in vocabulary], dtype=jnp.int32)
    raw = jax.random.randint(k_data, (batch, len(vocabulary)), 0, 1 << 16, dtype=jnp.int32)
    x = raw % sizes[None, :]

    out = enc(x)
    jax.block_until_ready(out)

    ref = enc.reference(x)
    assert out.shape == (batch, embedding_dim * len(vocabulary))
    # bf16 table/weight operands (f32 accumulation) vs. f32 reference.
    assert jnp.allclose(out, ref, atol=3e-2, rtol=3e-2), float(jnp.max(jnp.abs(out - ref)))

    print("KERNEL_OK")
</pallas_src>

<mosaic_0001>
module attributes {stable_mosaic.version = 11 : i64} {
  func.func @kernel(%arg0: i32, %arg1: i32, %arg2: memref<16x4xi32, #tpu.memory_space<vmem>>, %arg3: memref<4x16x32xbf16, #tpu.memory_space<vmem>>, %arg4: memref<128x128xbf16, #tpu.memory_space<vmem>>, %arg5: memref<1x128xf32, #tpu.memory_space<vmem>>, %arg6: memref<16x128xf32, #tpu.memory_space<vmem>>) attributes {dimension_semantics = [#tpu.dimension_semantics<parallel>, #tpu.dimension_semantics<parallel>], iteration_bounds = array<i64: 1, 1>, scalar_prefetch = 0 : i64, scratch_operands = 0 : i64, tpu.core_type = #tpu.core_type<tc>, window_params = [{transform_indices = @transform_0, window_bounds = array<i64: 16, 4>}, {pipeline_mode = #tpu.pipeline_mode<synchronous>, transform_indices = @transform_1, window_bounds = array<i64: 4, 16, 32>}, {transform_indices = @transform_2, window_bounds = array<i64: 128, 128>}, {transform_indices = @transform_3, window_bounds = array<i64: 1, 128>}, {transform_indices = @transform_4, window_bounds = array<i64: 16, 128>}]} {
    %cst = arith.constant 0.000000e+00 : f32
    %0 = vector.broadcast %cst : f32 to vector<16x128xf32>
    %1 = tpu.iota {dimensions = array<i32: 1>} : vector<16x16xi32>
    %c0 = arith.constant 0 : index
    %c0_0 = arith.constant 0 : index
    %2 = vector.load %arg2[%c0, %c0_0] : memref<16x4xi32, #tpu.memory_space<vmem>>, vector<16x1xi32>
    %3 = vector.broadcast %2 : vector<16x1xi32> to vector<16x16xi32>
    %4 = arith.cmpi eq, %1, %3 : vector<16x16xi32>
    %5 = arith.extui %4 : vector<16x16xi1> to vector<16x16xi32>
    %6 = arith.sitofp %5 : vector<16x16xi32> to vector<16x16xf32>
    %7 = arith.truncf %6 : vector<16x16xf32> to vector<16x16xbf16>
    %c0_1 = arith.constant 0 : index
    %c0_2 = arith.constant 0 : index
    %c0_3 = arith.constant 0 : index
    %8 = vector.load %arg3[%c0_1, %c0_2, %c0_3] : memref<4x16x32xbf16, #tpu.memory_space<vmem>>, vector<1x16x32xbf16>
    %9 = vector.shape_cast %8 : vector<1x16x32xbf16> to vector<16x32xbf16>
    %cst_4 = arith.constant dense<0.000000e+00> : vector<16x32xf32>
    %10 = tpu.matmul %7, %9, %cst_4 {dimension_numbers = #tpu.dot_dimension_numbers<[1], [0], [0], [1], [0, 0, 1, 1], [], []>} : vector<16x16xbf16>, vector<16x32xbf16>, vector<16x32xf32> -> vector<16x32xf32>
    %c0_5 = arith.constant 0 : index
    %c0_6 = arith.constant 0 : index
    %11 = vector.load %arg4[%c0_5, %c0_6] : memref<128x128xbf16, #tpu.memory_space<vmem>>, vector<32x128xbf16>
    %12 = arith.truncf %10 : vector<16x32xf32> to vector<16x32xbf16>
    %cst_7 = arith.constant dense<0.000000e+00> : vector<16x128xf32>
    %13 = tpu.matmul %12, %11, %cst_7 {dimension_numbers = #tpu.dot_dimension_numbers<[1], [0], [0], [1], [0, 0, 1, 1], [], []>} : vector<16x32xbf16>, vector<32x128xbf16>, vector<16x128xf32> -> vector<16x128xf32>
    %14 = arith.addf %0, %13 : vector<16x128xf32>
    %c0_8 = arith.constant 0 : index
    %c1 = arith.constant 1 : index
    %15 = vector.load %arg2[%c0_8, %c1] : memref<16x4xi32, #tpu.memory_space<vmem>>, vector<16x1xi32>
    %16 = vector.broadcast %15 : vector<16x1xi32> to vector<16x16xi32>
    %17 = arith.cmpi eq, %1, %16 : vector<16x16xi32>
    %18 = arith.extui %17 : vector<16x16xi1> to vector<16x16xi32>
    %19 = arith.sitofp %18 : vector<16x16xi32> to vector<16x16xf32>
    %20 = arith.truncf %19 : vector<16x16xf32> to vector<16x16xbf16>
    %c1_9 = arith.constant 1 : index
    %c0_10 = arith.constant 0 : index
    %c0_11 = arith.constant 0 : index
    %21 = vector.load %arg3[%c1_9, %c0_10, %c0_11] : memref<4x16x32xbf16, #tpu.memory_space<vmem>>, vector<1x16x32xbf16>
    %22 = vector.shape_cast %21 : vector<1x16x32xbf16> to vector<16x32xbf16>
    %cst_12 = arith.constant dense<0.000000e+00> : vector<16x32xf32>
    %23 = tpu.matmul %20, %22, %cst_12 {dimension_numbers = #tpu.dot_dimension_numbers<[1], [0], [0], [1], [0, 0, 1, 1], [], []>} : vector<16x16xbf16>, vector<16x32xbf16>, vector<16x32xf32> -> vector<16x32xf32>
    %c32 = arith.constant 32 : index
    %c0_13 = arith.constant 0 : index
    %24 = vector.load %arg4[%c32, %c0_13] : memref<128x128xbf16, #tpu.memory_space<vmem>>, vector<32x128xbf16>
    %25 = arith.truncf %23 : vector<16x32xf32> to vector<16x32xbf16>
    %cst_14 = arith.constant dense<0.000000e+00> : vector<16x128xf32>
    %26 = tpu.matmul %25, %24, %cst_14 {dimension_numbers = #tpu.dot_dimension_numbers<[1], [0], [0], [1], [0, 0, 1, 1], [], []>} : vector<16x32xbf16>, vector<32x128xbf16>, vector<16x128xf32> -> vector<16x128xf32>
    %27 = arith.addf %14, %26 : vector<16x128xf32>
    %c0_15 = arith.constant 0 : index
    %c2 = arith.constant 2 : index
    %28 = vector.load %arg2[%c0_15, %c2] : memref<16x4xi32, #tpu.memory_space<vmem>>, vector<16x1xi32>
    %29 = vector.broadcast %28 : vector<16x1xi32> to vector<16x16xi32>
    %30 = arith.cmpi eq, %1, %29 : vector<16x16xi32>
    %31 = arith.extui %30 : vector<16x16xi1> to vector<16x16xi32>
    %32 = arith.sitofp %31 : vector<16x16xi32> to vector<16x16xf32>
    %33 = arith.truncf %32 : vector<16x16xf32> to vector<16x16xbf16>
    %c2_16 = arith.constant 2 : index
    %c0_17 = arith.constant 0 : index
    %c0_18 = arith.constant 0 : index
    %34 = vector.load %arg3[%c2_16, %c0_17, %c0_18] : memref<4x16x32xbf16, #tpu.memory_space<vmem>>, vector<1x16x32xbf16>
    %35 = vector.shape_cast %34 : vector<1x16x32xbf16> to vector<16x32xbf16>
    %cst_19 = arith.constant dense<0.000000e+00> : vector<16x32xf32>
    %36 = tpu.matmul %33, %35, %cst_19 {dimension_numbers = #tpu.dot_dimension_numbers<[1], [0], [0], [1], [0, 0, 1, 1], [], []>} : vector<16x16xbf16>, vector<16x32xbf16>, vector<16x32xf32> -> vector<16x32xf32>
    %c64 = arith.constant 64 : index
    %c0_20 = arith.constant 0 : index
    %37 = vector.load %arg4[%c64, %c0_20] : memref<128x128xbf16, #tpu.memory_space<vmem>>, vector<32x128xbf16>
    %38 = arith.truncf %36 : vector<16x32xf32> to vector<16x32xbf16>
    %cst_21 = arith.constant dense<0.000000e+00> : vector<16x128xf32>
    %39 = tpu.matmul %38, %37, %cst_21 {dimension_numbers = #tpu.dot_dimension_numbers<[1], [0], [0], [1], [0, 0, 1, 1], [], []>} : vector<16x32xbf16>, vector<32x128xbf16>, vector<16x128xf32> -> vector<16x128xf32>
    %40 = arith.addf %27, %39 : vector<16x128xf32>
    %c0_22 = arith.constant 0 : index
    %c3 = arith.constant 3 : index
    %41 = vector.load %arg2[%c0_22, %c3] : memref<16x4xi32, #tpu.memory_space<vmem>>, vector<16x1xi32>
    %42 = vector.broadcast %41 : vector<16x1xi32> to vector<16x16xi32>
    %43 = arith.cmpi eq, %1, %42 : vector<16x16xi32>
    %44 = arith.extui %43 : vector<16x16xi1> to vector<16x16xi32>
    %45 = arith.sitofp %44 : vector<16x16xi32> to vector<16x16xf32>
    %46 = arith.truncf %45 : vector<16x16xf32> to vector<16x16xbf16>
    %c3_23 = arith.constant 3 : index
    %c0_24 = arith.constant 0 : index
    %c0_25 = arith.constant 0 : index
    %47 = vector.load %arg3[%c3_23, %c0_24, %c0_25] : memref<4x16x32xbf16, #tpu.memory_space<vmem>>, vector<1x16x32xbf16>
    %48 = vector.shape_cast %47 : vector<1x16x32xbf16> to vector<16x32xbf16>
    %cst_26 = arith.constant dense<0.000000e+00> : vector<16x32xf32>
    %49 = tpu.matmul %46, %48, %cst_26 {dimension_numbers = #tpu.dot_dimension_numbers<[1], [0], [0], [1], [0, 0, 1, 1], [], []>} : vector<16x16xbf16>, vector<16x32xbf16>, vector<16x32xf32> -> vector<16x32xf32>
    %c96 = arith.constant 96 : index
    %c0_27 = arith.constant 0 : index
    %50 = vector.load %arg4[%c96, %c0_27] : memref<128x128xbf16, #tpu.memory_space<vmem>>, vector<32x128xbf16>
    %51 = arith.truncf %49 : vector<16x32xf32> to vector<16x32xbf16>
    %cst_28 = arith.constant dense<0.000000e+00> : vector<16x128xf32>
    %52 = tpu.matmul %51, %50, %cst_28 {dimension_numbers = #tpu.dot_dimension_numbers<[1], [0], [0], [1], [0, 0, 1, 1], [], []>} : vector<16x32xbf16>, vector<32x128xbf16>, vector<16x128xf32> -> vector<16x128xf32>
    %53 = arith.addf %40, %52 : vector<16x128xf32>
    %c0_29 = arith.constant 0 : index
    %c0_30 = arith.constant 0 : index
    %54 = vector.load %arg5[%c0_29, %c0_30] : memref<1x128xf32, #tpu.memory_space<vmem>>, vector<1x128xf32>
    %55 = vector.broadcast %54 : vector<1x128xf32> to vector<16x128xf32>
    %56 = arith.addf %53, %55 : vector<16x128xf32>
    %cst_31 = arith.constant 0.000000e+00 : f32
    %57 = vector.broadcast %cst_31 : f32 to vector<16x128xf32>
    %58 = arith.maximumf %56, %57 : vector<16x128xf32>
    %c0_32 = arith.constant 0 : index
    %c0_33 = arith.constant 0 : index
    %59 = vector.load %arg6[%c0_32, %c0_33] : memref<16x128xf32, #tpu.memory_space<vmem>>, vector<16x128xf32>
    tpu.vector_store %arg6[%c0_32, %c0_33], %58 {strides = array<i32>} : memref<16x128xf32, #tpu.memory_space<vmem>>, vector<16x128xf32>,
    return
  }
  func.func @transform_0(%arg0: i32, %arg1: i32) -> (i32, i32) {
    %c0_i32 = arith.constant 0 : i32
    %c0_i32_0 = arith.constant 0 : i32
    return %arg1, %c0_i32 : i32, i32
  }
  func.func @transform_1(%arg0: i32, %arg1: i32) -> (i32, i32, i32) {
    %c0_i32 = arith.constant 0 : i32
    %c0_i32_0 = arith.constant 0 : i32
    %c0_i32_1 = arith.constant 0 : i32
    %c0_i32_2 = arith.constant 0 : i32
    return %c0_i32, %c0_i32_0, %c0_i32_1 : i32, i32, i32
  }
  func.func @transform_2(%arg0: i32, %arg1: i32) -> (i32, i32) {
    %c0_i32 = arith.constant 0 : i32
    %c0_i32_0 = arith.constant 0 : i32
    return %c0_i32, %arg0 : i32, i32
  }
  func.func @transform_3(%arg0: i32, %arg1: i32) -> (i32, i32) {
    %c0_i32 = arith.constant 0 : i32
    %c0_i32_0 = arith.constant 0 : i32
    return %c0_i32, %arg0 : i32, i32
  }
  func.func @transform_4(%arg0: i32, %arg1: i32) -> (i32, i32) {
    %c0_i32 = arith.constant 0 : i32
    return %arg1, %arg0 : i32, i32
  }
}

</mosaic_0001>

<llo_original>
// kernel: tpu_custom_call.1
$region0: #{tpu_custom_call.1}
  #allocation0 [shape = 'u32[]', space=smem, size = 0x4, offset = 0x4, fixed_abs, tag = 'smem constant byte address 0x4 - core index']
  #allocation1 [shape = 'u32[144,128]{1,0:T(1,128)}', space=vmem, size = 0x12000, scoped, tag = 'internal scratch']
  %s0 = inlined_call_operand.vmem [shape: s32[16,4], index: 0, kind: input, shape index: {}]
  %s1 = inlined_call_operand.hbm [shape: bf16[4,16,32], index: 1, kind: input, shape index: {}]
  %s2 = inlined_call_operand.hbm [shape: bf16[128,128], index: 2, kind: input, shape index: {}]
  %s3 = inlined_call_operand.vmem [shape: f32[1,128], index: 3, kind: input, shape index: {}]
  %s4 = inlined_call_operand.hbm [shape: f32[16,128], index: 4, kind: output, shape index: {}]
  %s5 = sld [smem:[#allocation0]]
  $region34: #{tpu_custom_call.1} parent=0
    _
  %s7 = ssub.s32 1, %s5
  %s8 = scalar_select 0, %s7, %s5
  $region1: #{tpu_custom_call.1} parent=0
    #allocation2 [shape = 'u8[16384]{0}', space=vmem, size = 0x4000, scoped, tag = 'input window, operand 1, single buffered']
    #allocation3 [shape = 's32[1]{0}', space=sflag, size = 0x4, scoped, tag = 'scoped memory for tpu_custom_call.1']
    #allocation4 [shape = 's32[1]{0}', space=sflag, size = 0x4, scoped, tag = 'scoped memory for tpu_custom_call.1']
    #allocation5 [shape = 'u8[32768]{0}', space=vmem, size = 0x8000, scoped, tag = 'input window, operand 2, single buffered']
    #allocation6 [shape = 's32[1]{0}', space=sflag, size = 0x4, scoped, tag = 'scoped memory for tpu_custom_call.1']
    #allocation7 [shape = 'u8[8192]{0}', space=vmem, size = 0x2000, scoped, tag = 'output window, operand 0, single buffered']
    %9 = vsyncpa [#allocation3], 0
    %10 = vsyncpa [#allocation6], 0
    %11 = vsyncpa [#allocation4], 0
    // Predicated region
    $region2: #{tpu_custom_call.1} parent=1 // pred_check
      _
    $region3: #{tpu_custom_call.1} parent=1 // pred_check_branch
      %13 = sbr.rel (0) target = $region5
    $region4: #{tpu_custom_call.1} parent=1 // pred_region
      _
    $region5: #{tpu_custom_call.1} parent=1 // pred_fallthru
      _
    // Predicated region
    $region6: #{tpu_custom_call.1} parent=1 // pred_check
      _
    $region7: #{tpu_custom_call.1} parent=1 // pred_check_branch
      %15 = sbr.rel (0) target = $region9
    $region8: #{tpu_custom_call.1} parent=1 // pred_region
      %s17 = ssub.s32 512, 512
      %18 = vsyncadd [#allocation3], %s17
      %s19 = sshll.u32 [#allocation2], 4
      %s20 = int_to_ptr.vmem [resolvable:$true] %s19
      %25 = dma.hbm_to_vmem [thread:$0]  %s1, 512, %s20, [#allocation3], 64, 64, 4
    $region9: #{tpu_custom_call.1} parent=1 // pred_fallthru
      _
    // Predicated region
    $region10: #{tpu_custom_call.1} parent=1 // pred_check
      _
    $region11: #{tpu_custom_call.1} parent=1 // pred_check_branch
      %27 = sbr.rel (0) target = $region13
    $region12: #{tpu_custom_call.1} parent=1 // pred_region
      %s29 = ssub.s32 1024, 1024
      %30 = vsyncadd [#allocation6], %s29
      %s31 = sshll.u32 [#allocation5], 4
      %s32 = int_to_ptr.vmem [resolvable:$true] %s31
      %37 = dma.hbm_to_vmem [thread:$0]  %s2, 1024, %s32, [#allocation6], 64, 64, 4
    $region13: #{tpu_custom_call.1} parent=1 // pred_fallthru
      _
    // Predicated region
    $region14: #{tpu_custom_call.1} parent=1 // pred_check
      _
    $region15: #{tpu_custom_call.1} parent=1 // pred_check_branch
      %39 = sbr.rel (0) target = $region17
    $region16: #{tpu_custom_call.1} parent=1 // pred_region
      _
    $region17: #{tpu_custom_call.1} parent=1 // pred_fallthru
      _
    // Predicated region
    $region18: #{tpu_custom_call.1} parent=1 // pred_check
      _
    $region19: #{tpu_custom_call.1} parent=1 // pred_check_branch
      %41 = sbr.rel (0) target = $region21
    $region20: #{tpu_custom_call.1} parent=1 // pred_region
      %42 = dma.done [#allocation3], 512
    $region21: #{tpu_custom_call.1} parent=1 // pred_fallthru
      _
    // Predicated region
    $region22: #{tpu_custom_call.1} parent=1 // pred_check
      _
    $region23: #{tpu_custom_call.1} parent=1 // pred_check_branch
      %44 = sbr.rel (0) target = $region25
    $region24: #{tpu_custom_call.1} parent=1 // pred_region
      %45 = dma.done [#allocation6], 1024
    $region25: #{tpu_custom_call.1} parent=1 // pred_fallthru
      _
    %v47 = vlaneseq
    %v48 = vand.u32 %v47, 127
    %v49 = vld [vmem:[%s0] sm:$0xff]
    %v50 = vld [vmem:[%s0 + $0x8] sm:$0xff]
    %51 = vset.pattern.permute.xlu0 0
    %52 = vperm.xlu0 %51, %v49
    %v53 = vpop.permute.xlu0 %52
    %54 = vset.pattern.permute.xlu0 0
    %55 = vperm.xlu0 %54, %v50
    %v56 = vpop.permute.xlu0 %55
    %vm57 = vcmp.eq.s32.totalorder %v48, %v53
    %vm58 = vcmp.eq.s32.totalorder %v48, %v56
    %v59 = vsel %vm57, 1, 0
    %v60 = vsel %vm58, 1, 0
    %v61 = vcvt.s32.f32 %v59
    %v62 = vcvt.s32.f32 %v60
    %v63 = vpack.c.bf16 %v62, %v61
    %v64 = vld [vmem:[#allocation2] sm:$0xf]
    %v65 = vld [vmem:[#allocation2 + $0x4] sm:$0xf]
    %v68 = vunpack.c.l.b16 %v64
    %v69 = vunpack.c.l.b16 %v65
    %v70 = vpack.c.b16 %v69, %v68
    %vm72 = vcmask 130048
    %v74 = vsel %vm72, %v63, 0
    %76 = vmatprep.subr.bf16.mxu0 0
    %77 = vmatpush1.bf16.msra.mxu0 %v70
    %78 = vmatprep.subr.bf16.mxu0 0
    %79 = vmatpush1.bf16.msra.mxu0 0
    %80 = vmatprep.subr.bf16.mxu0 0
    %81 = vmatpush1.bf16.msra.mxu0 0
    %82 = vmatprep.subr.bf16.mxu0 0
    %83 = vmatpush1.bf16.msra.mxu0 0
    %84 = vmatprep.subr.bf16.mxu0 0
    %85 = vmatpush1.bf16.msra.mxu0 0
    %86 = vmatprep.subr.bf16.mxu0 0
    %87 = vmatpush1.bf16.msra.mxu0 0
    %88 = vmatprep.subr.bf16.mxu0 0
    %89 = vmatpush1.bf16.msra.mxu0 0
    %90 = vmatprep.subr.bf16.mxu0 0
    %91 = vmatpush1.bf16.msra.mxu0 0
    %92 = vmatprep.subr.bf16.mxu0 0
    %93 = vmatpush1.bf16.msra.mxu0 0
    %94 = vmatprep.subr.bf16.mxu0 0
    %95 = vmatpush1.bf16.msra.mxu0 0
    %96 = vmatprep.subr.bf16.mxu0 0
    %97 = vmatpush1.bf16.msra.mxu0 0
    %98 = vmatprep.subr.bf16.mxu0 0
    %99 = vmatpush1.bf16.msra.mxu0 0
    %100 = vmatprep.subr.bf16.mxu0 0
    %101 = vmatpush1.bf16.msra.mxu0 0
    %102 = vmatprep.subr.bf16.mxu0 0
    %103 = vmatpush1.bf16.msra.mxu0 0
    %104 = vmatprep.subr.bf16.mxu0 0
    %105 = vmatpush1.bf16.msra.mxu0 0
    %106 = vmatprep.subr.bf16.mxu0 0
    %107 = vmatpush1.bf16.msra.mxu0 0
    %108 = vmatprep.mubr.bf16.mxu0 0
    %109 = vmatmul.mubr.bf16.gmra.mrb[0].mxu0 %v74
    %v110 = vpop.f32.mrb[0].mxu0
    %v111 = vadd.f32 0.0, %v110
    %v112 = vpop.f32.mrb[0].mxu0
    %v113 = vpop.f32.mrb[0].mxu0
    %v114 = vadd.f32 0.0, %v113
    %v115 = vpop.f32.mrb[0].mxu0
    %116 = vdwg.mxu0
    %v117 = vld [vmem:[#allocation5] sm:$0xf]
    %v118 = vld [vmem:[#allocation5 + $0x4] sm:$0xf]
    %v119 = vld [vmem:[#allocation5 + $0x8] sm:$0xf]
    %v120 = vld [vmem:[#allocation5 + $0xc] sm:$0xf]
    %v121 = vpack.c.bf16 %v114, %v111
    %122 = vset.pattern.permute.xlu0 1
    %123 = vperm.xlu0 %122, %v49
    %v124 = vpop.permute.xlu0 %123
    %125 = vset.pattern.permute.xlu0 1
    %126 = vperm.xlu0 %125, %v50
    %v127 = vpop.permute.xlu0 %126
    %vm128 = vcmp.eq.s32.totalorder %v48, %v124
    %vm129 = vcmp.eq.s32.totalorder %v48, %v127
    %v130 = vsel %vm128, 1, 0
    %v131 = vsel %vm129, 1, 0
    %v132 = vcvt.s32.f32 %v130
    %v133 = vcvt.s32.f32 %v131
    %v134 = vpack.c.bf16 %v133, %v132
    %s135 = scalar_lea.vmem [#allocation2], 8
    %v136 = vld [vmem:[%s135] sm:$0xf]
    %v137 = vld [vmem:[%s135 + $0x4] sm:$0xf]
    %v140 = vunpack.c.l.b16 %v136
    %v141 = vunpack.c.l.b16 %v137
    %v142 = vpack.c.b16 %v141, %v140
    %v145 = vsel %vm72, %v134, 0
    %147 = vmatprep.subr.bf16.mxu0 0
    %148 = vmatpush1.bf16.msra.mxu0 %v142
    %149 = vmatprep.subr.bf16.mxu0 0
    %150 = vmatpush1.bf16.msra.mxu0 0
    %151 = vmatprep.subr.bf16.mxu0 0
    %152 = vmatpush1.bf16.msra.mxu0 0
    %153 = vmatprep.subr.bf16.mxu0 0
    %154 = vmatpush1.bf16.msra.mxu0 0
    %155 = vmatprep.subr.bf16.mxu0 0
    %156 = vmatpush1.bf16.msra.mxu0 0
    %157 = vmatprep.subr.bf16.mxu0 0
    %158 = vmatpush1.bf16.msra.mxu0 0
    %159 = vmatprep.subr.bf16.mxu0 0
    %160 = vmatpush1.bf16.msra.mxu0 0
    %161 = vmatprep.subr.bf16.mxu0 0
    %162 = vmatpush1.bf16.msra.mxu0 0
    %163 = vmatprep.subr.bf16.mxu0 0
    %164 = vmatpush1.bf16.msra.mxu0 0
    %165 = vmatprep.subr.bf16.mxu0 0
    %166 = vmatpush1.bf16.msra.mxu0 0
    %167 = vmatprep.subr.bf16.mxu0 0
    %168 = vmatpush1.bf16.msra.mxu0 0
    %169 = vmatprep.subr.bf16.mxu0 0
    %170 = vmatpush1.bf16.msra.mxu0 0
    %171 = vmatprep.subr.bf16.mxu0 0
    %172 = vmatpush1.bf16.msra.mxu0 0
    %173 = vmatprep.subr.bf16.mxu0 0
    %174 = vmatpush1.bf16.msra.mxu0 0
    %175 = vmatprep.subr.bf16.mxu0 0
    %176 = vmatpush1.bf16.msra.mxu0 0
    %177 = vmatprep.subr.bf16.mxu0 0
    %178 = vmatpush1.bf16.msra.mxu0 0
    %179 = vmatprep.mubr.bf16.mxu0 0
    %180 = vmatmul.mubr.bf16.gmra.mrb[0].mxu0 %v145
    %v181 = vpop.f32.mrb[0].mxu0
    %v182 = vadd.f32 0.0, %v181
    %v183 = vpop.f32.mrb[0].mxu0
    %v184 = vpop.f32.mrb[0].mxu0
    %v185 = vadd.f32 0.0, %v184
    %v186 = vpop.f32.mrb[0].mxu0
    %187 = vdwg.mxu0
    %v188 = vld [vmem:[#allocation5 + $0x10] sm:$0xf]
    %v189 = vld [vmem:[#allocation5 + $0x14] sm:$0xf]
    %v190 = vld [vmem:[#allocation5 + $0x18] sm:$0xf]
    %v191 = vld [vmem:[#allocation5 + $0x1c] sm:$0xf]
    %v192 = vpack.c.bf16 %v185, %v182
    %v197 = vunpack.c.l.b16 %v188
    %v198 = vunpack.c.l.b16 %v189
    %v199 = vunpack.c.l.b16 %v190
    %v200 = vunpack.c.l.b16 %v191
    %v201 = vpack.c.b16 %v198, %v197
    %v202 = vpack.c.b16 %v200, %v199
    %vm205 = vcmask 261120
    %v207 = vsel %vm205, %v192, 0
    %209 = vmatprep.subr.bf16.mxu0 0
    %210 = vmatpush1.bf16.msra.mxu0 %v201
    %211 = vmatprep.subr.bf16.mxu0 0
    %212 = vmatpush1.bf16.msra.mxu0 %v202
    %213 = vmatprep.subr.bf16.mxu0 0
    %214 = vmatpush1.bf16.msra.mxu0 0
    %215 = vmatprep.subr.bf16.mxu0 0
    %216 = vmatpush1.bf16.msra.mxu0 0
    %217 = vmatprep.subr.bf16.mxu0 0
    %218 = vmatpush1.bf16.msra.mxu0 0
    %219 = vmatprep.subr.bf16.mxu0 0
    %220 = vmatpush1.bf16.msra.mxu0 0
    %221 = vmatprep.subr.bf16.mxu0 0
    %222 = vmatpush1.bf16.msra.mxu0 0
    %223 = vmatprep.subr.bf16.mxu0 0
    %224 = vmatpush1.bf16.msra.mxu0 0
    %225 = vmatprep.subr.bf16.mxu0 0
    %226 = vmatpush1.bf16.msra.mxu0 0
    %227 = vmatprep.subr.bf16.mxu0 0
    %228 = vmatpush1.bf16.msra.mxu0 0
    %229 = vmatprep.subr.bf16.mxu0 0
    %230 = vmatpush1.bf16.msra.mxu0 0
    %231 = vmatprep.subr.bf16.mxu0 0
    %232 = vmatpush1.bf16.msra.mxu0 0
    %233 = vmatprep.subr.bf16.mxu0 0
    %234 = vmatpush1.bf16.msra.mxu0 0
    %235 = vmatprep.subr.bf16.mxu0 0
    %236 = vmatpush1.bf16.msra.mxu0 0
    %237 = vmatprep.subr.bf16.mxu0 0
    %238 = vmatpush1.bf16.msra.mxu0 0
    %239 = vmatprep.subr.bf16.mxu0 0
    %240 = vmatpush1.bf16.msra.mxu0 0
    %241 = vmatprep.mubr.bf16.mxu0 0
    %242 = vmatmul.mubr.bf16.gmra.mrb[0].mxu0 %v207
    %v243 = vpop.f32.mrb[0].mxu0
    %v244 = vadd.f32 0.0, %v243
    %v245 = vpop.f32.mrb[0].mxu0
    %v246 = vpop.f32.mrb[0].mxu0
    %v247 = vadd.f32 0.0, %v246
    %v248 = vpop.f32.mrb[0].mxu0
    %249 = vdwg.mxu0
    %v254 = vunpack.c.l.b16 %v117
    %v255 = vunpack.c.l.b16 %v118
    %v256 = vunpack.c.l.b16 %v119
    %v257 = vunpack.c.l.b16 %v120
    %v258 = vpack.c.b16 %v255, %v254
    %v259 = vpack.c.b16 %v257, %v256
    %v263 = vsel %vm205, %v121, 0
    %265 = vmatprep.subr.bf16.mxu0 0
    %266 = vmatpush1.bf16.msra.mxu0 %v258
    %267 = vmatprep.subr.bf16.mxu0 0
    %268 = vmatpush1.bf16.msra.mxu0 %v259
    %269 = vmatprep.subr.bf16.mxu0 0
    %270 = vmatpush1.bf16.msra.mxu0 0
    %271 = vmatprep.subr.bf16.mxu0 0
    %272 = vmatpush1.bf16.msra.mxu0 0
    %273 = vmatprep.subr.bf16.mxu0 0
    %274 = vmatpush1.bf16.msra.mxu0 0
    %275 = vmatprep.subr.bf16.mxu0 0
    %276 = vmatpush1.bf16.msra.mxu0 0
    %277 = vmatprep.subr.bf16.mxu0 0
    %278 = vmatpush1.bf16.msra.mxu0 0
    %279 = vmatprep.subr.bf16.mxu0 0
    %280 = vmatpush1.bf16.msra.mxu0 0
    %281 = vmatprep.subr.bf16.mxu0 0
    %282 = vmatpush1.bf16.msra.mxu0 0
    %283 = vmatprep.subr.bf16.mxu0 0
    %284 = vmatpush1.bf16.msra.mxu0 0
    %285 = vmatprep.subr.bf16.mxu0 0
    %286 = vmatpush1.bf16.msra.mxu0 0
    %287 = vmatprep.subr.bf16.mxu0 0
    %288 = vmatpush1.bf16.msra.mxu0 0
    %289 = vmatprep.subr.bf16.mxu0 0
    %290 = vmatpush1.bf16.msra.mxu0 0
    %291 = vmatprep.subr.bf16.mxu0 0
    %292 = vmatpush1.bf16.msra.mxu0 0
    %293 = vmatprep.subr.bf16.mxu0 0
    %294 = vmatpush1.bf16.msra.mxu0 0
    %295 = vmatprep.subr.bf16.mxu0 0
    %296 = vmatpush1.bf16.msra.mxu0 0
    %297 = vmatprep.mubr.bf16.mxu0 0
    %298 = vmatmul.mubr.bf16.gmra.mrb[0].mxu0 %v263
    %v299 = vpop.f32.mrb[0].mxu0
    %v300 = vadd.f32 %v244, %v299
    %v301 = vpop.f32.mrb[0].mxu0
    %v302 = vpop.f32.mrb[0].mxu0
    %v303 = vadd.f32 %v247, %v302
    %v304 = vpop.f32.mrb[0].mxu0
    %305 = vdwg.mxu0
    %306 = vset.pattern.permute.xlu0 2
    %307 = vperm.xlu0 %306, %v49
    %v308 = vpop.permute.xlu0 %307
    %309 = vset.pattern.permute.xlu0 2
    %310 = vperm.xlu0 %309, %v50
    %v311 = vpop.permute.xlu0 %310
    %vm312 = vcmp.eq.s32.totalorder %v48, %v308
    %vm313 = vcmp.eq.s32.totalorder %v48, %v311
    %v314 = vsel %vm312, 1, 0
    %v315 = vsel %vm313, 1, 0
    %v316 = vcvt.s32.f32 %v314
    %v317 = vcvt.s32.f32 %v315
    %v318 = vpack.c.bf16 %v317, %v316
    %s319 = scalar_lea.vmem [#allocation2], 16
    %v320 = vld [vmem:[%s319] sm:$0xf]
    %v321 = vld [vmem:[%s319 + $0x4] sm:$0xf]
    %v324 = vunpack.c.l.b16 %v320
    %v325 = vunpack.c.l.b16 %v321
    %v326 = vpack.c.b16 %v325, %v324
    %v329 = vsel %vm72, %v318, 0
    %331 = vmatprep.subr.bf16.mxu0 0
    %332 = vmatpush1.bf16.msra.mxu0 %v326
    %333 = vmatprep.subr.bf16.mxu0 0
    %334 = vmatpush1.bf16.msra.mxu0 0
    %335 = vmatprep.subr.bf16.mxu0 0
    %336 = vmatpush1.bf16.msra.mxu0 0
    %337 = vmatprep.subr.bf16.mxu0 0
    %338 = vmatpush1.bf16.msra.mxu0 0
    %339 = vmatprep.subr.bf16.mxu0 0
    %340 = vmatpush1.bf16.msra.mxu0 0
    %341 = vmatprep.subr.bf16.mxu0 0
    %342 = vmatpush1.bf16.msra.mxu0 0
    %343 = vmatprep.subr.bf16.mxu0 0
    %344 = vmatpush1.bf16.msra.mxu0 0
    %345 = vmatprep.subr.bf16.mxu0 0
    %346 = vmatpush1.bf16.msra.mxu0 0
    %347 = vmatprep.subr.bf16.mxu0 0
    %348 = vmatpush1.bf16.msra.mxu0 0
    %349 = vmatprep.subr.bf16.mxu0 0
    %350 = vmatpush1.bf16.msra.mxu0 0
    %351 = vmatprep.subr.bf16.mxu0 0
    %352 = vmatpush1.bf16.msra.mxu0 0
    %353 = vmatprep.subr.bf16.mxu0 0
    %354 = vmatpush1.bf16.msra.mxu0 0
    %355 = vmatprep.subr.bf16.mxu0 0
    %356 = vmatpush1.bf16.msra.mxu0 0
    %357 = vmatprep.subr.bf16.mxu0 0
    %358 = vmatpush1.bf16.msra.mxu0 0
    %359 = vmatprep.subr.bf16.mxu0 0
    %360 = vmatpush1.bf16.msra.mxu0 0
    %361 = vmatprep.subr.bf16.mxu0 0
    %362 = vmatpush1.bf16.msra.mxu0 0
    %363 = vmatprep.mubr.bf16.mxu0 0
    %364 = vmatmul.mubr.bf16.gmra.mrb[0].mxu0 %v329
    %v365 = vpop.f32.mrb[0].mxu0
    %v366 = vadd.f32 0.0, %v365
    %v367 = vpop.f32.mrb[0].mxu0
    %v368 = vpop.f32.mrb[0].mxu0
    %v369 = vadd.f32 0.0, %v368
    %v370 = vpop.f32.mrb[0].mxu0
    %371 = vdwg.mxu0
    %v372 = vld [vmem:[#allocation5 + $0x20] sm:$0xf]
    %v373 = vld [vmem:[#allocation5 + $0x24] sm:$0xf]
    %v374 = vld [vmem:[#allocation5 + $0x28] sm:$0xf]
    %v375 = vld [vmem:[#allocation5 + $0x2c] sm:$0xf]
    %v376 = vpack.c.bf16 %v369, %v366
    %v381 = vunpack.c.l.b16 %v372
    %v382 = vunpack.c.l.b16 %v373
    %v383 = vunpack.c.l.b16 %v374
    %v384 = vunpack.c.l.b16 %v375
    %v385 = vpack.c.b16 %v382, %v381
    %v386 = vpack.c.b16 %v384, %v383
    %v390 = vsel %vm205, %v376, 0
    %392 = vmatprep.subr.bf16.mxu0 0
    %393 = vmatpush1.bf16.msra.mxu0 %v385
    %394 = vmatprep.subr.bf16.mxu0 0
    %395 = vmatpush1.bf16.msra.mxu0 %v386
    %396 = vmatprep.subr.bf16.mxu0 0
    %397 = vmatpush1.bf16.msra.mxu0 0
    %398 = vmatprep.subr.bf16.mxu0 0
    %399 = vmatpush1.bf16.msra.mxu0 0
    %400 = vmatprep.subr.bf16.mxu0 0
    %401 = vmatpush1.bf16.msra.mxu0 0
    %402 = vmatprep.subr.bf16.mxu0 0
    %403 = vmatpush1.bf16.msra.mxu0 0
    %404 = vmatprep.subr.bf16.mxu0 0
    %405 = vmatpush1.bf16.msra.mxu0 0
    %406 = vmatprep.subr.bf16.mxu0 0
    %407 = vmatpush1.bf16.msra.mxu0 0
    %408 = vmatprep.subr.bf16.mxu0 0
    %409 = vmatpush1.bf16.msra.mxu0 0
    %410 = vmatprep.subr.bf16.mxu0 0
    %411 = vmatpush1.bf16.msra.mxu0 0
    %412 = vmatprep.subr.bf16.mxu0 0
    %413 = vmatpush1.bf16.msra.mxu0 0
    %414 = vmatprep.subr.bf16.mxu0 0
    %415 = vmatpush1.bf16.msra.mxu0 0
    %416 = vmatprep.subr.bf16.mxu0 0
    %417 = vmatpush1.bf16.msra.mxu0 0
    %418 = vmatprep.subr.bf16.mxu0 0
    %419 = vmatpush1.bf16.msra.mxu0 0
    %420 = vmatprep.subr.bf16.mxu0 0
    %421 = vmatpush1.bf16.msra.mxu0 0
    %422 = vmatprep.subr.bf16.mxu0 0
    %423 = vmatpush1.bf16.msra.mxu0 0
    %424 = vmatprep.mubr.bf16.mxu0 0
    %425 = vmatmul.mubr.bf16.gmra.mrb[0].mxu0 %v390
    %v426 = vpop.f32.mrb[0].mxu0
    %v427 = vadd.f32 0.0, %v426
    %v428 = vpop.f32.mrb[0].mxu0
    %v429 = vpop.f32.mrb[0].mxu0
    %v430 = vadd.f32 0.0, %v429
    %v431 = vpop.f32.mrb[0].mxu0
    %432 = vdwg.mxu0
    %v433 = vadd.f32 %v300, %v427
    %v434 = vadd.f32 %v303, %v430
    %435 = vset.pattern.permute.xlu0 3
    %436 = vperm.xlu0 %435, %v49
    %v437 = vpop.permute.xlu0 %436
    %438 = vset.pattern.permute.xlu0 3
    %439 = vperm.xlu0 %438, %v50
    %v440 = vpop.permute.xlu0 %439
    %vm441 = vcmp.eq.s32.totalorder %v48, %v437
    %vm442 = vcmp.eq.s32.totalorder %v48, %v440
    %v443 = vsel %vm441, 1, 0
    %v444 = vsel %vm442, 1, 0
    %v445 = vcvt.s32.f32 %v443
    %v446 = vcvt.s32.f32 %v444
    %v447 = vpack.c.bf16 %v446, %v445
    %s448 = scalar_lea.vmem [#allocation2], 24
    %v449 = vld [vmem:[%s448] sm:$0xf]
    %v450 = vld [vmem:[%s448 + $0x4] sm:$0xf]
    %v453 = vunpack.c.l.b16 %v449
    %v454 = vunpack.c.l.b16 %v450
    %v455 = vpack.c.b16 %v454, %v453
    %v458 = vsel %vm72, %v447, 0
    %460 = vmatprep.subr.bf16.mxu0 0
    %461 = vmatpush1.bf16.msra.mxu0 %v455
    %462 = vmatprep.subr.bf16.mxu0 0
    %463 = vmatpush1.bf16.msra.mxu0 0
    %464 = vmatprep.subr.bf16.mxu0 0
    %465 = vmatpush1.bf16.msra.mxu0 0
    %466 = vmatprep.subr.bf16.mxu0 0
    %467 = vmatpush1.bf16.msra.mxu0 0
    %468 = vmatprep.subr.bf16.mxu0 0
    %469 = vmatpush1.bf16.msra.mxu0 0
    %470 = vmatprep.subr.bf16.mxu0 0
    %471 = vmatpush1.bf16.msra.mxu0 0
    %472 = vmatprep.subr.bf16.mxu0 0
    %473 = vmatpush1.bf16.msra.mxu0 0
    %474 = vmatprep.subr.bf16.mxu0 0
    %475 = vmatpush1.bf16.msra.mxu0 0
    %476 = vmatprep.subr.bf16.mxu0 0
    %477 = vmatpush1.bf16.msra.mxu0 0
    %478 = vmatprep.subr.bf16.mxu0 0
    %479 = vmatpush1.bf16.msra.mxu0 0
    %480 = vmatprep.subr.bf16.mxu0 0
    %481 = vmatpush1.bf16.msra.mxu0 0
    %482 = vmatprep.subr.bf16.mxu0 0
    %483 = vmatpush1.bf16.msra.mxu0 0
    %484 = vmatprep.subr.bf16.mxu0 0
    %485 = vmatpush1.bf16.msra.mxu0 0
    %486 = vmatprep.subr.bf16.mxu0 0
    %487 = vmatpush1.bf16.msra.mxu0 0
    %488 = vmatprep.subr.bf16.mxu0 0
    %489 = vmatpush1.bf16.msra.mxu0 0
    %490 = vmatprep.subr.bf16.mxu0 0
    %491 = vmatpush1.bf16.msra.mxu0 0
    %492 = vmatprep.mubr.bf16.mxu0 0
    %493 = vmatmul.mubr.bf16.gmra.mrb[0].mxu0 %v458
    %v494 = vpop.f32.mrb[0].mxu0
    %v495 = vadd.f32 0.0, %v494
    %v496 = vpop.f32.mrb[0].mxu0
    %v497 = vpop.f32.mrb[0].mxu0
    %v498 = vadd.f32 0.0, %v497
    %v499 = vpop.f32.mrb[0].mxu0
    %500 = vdwg.mxu0
    %v501 = vld [vmem:[#allocation5 + $0x30] sm:$0xf]
    %v502 = vld [vmem:[#allocation5 + $0x34] sm:$0xf]
    %v503 = vld [vmem:[#allocation5 + $0x38] sm:$0xf]
    %v504 = vld [vmem:[#allocation5 + $0x3c] sm:$0xf]
    %v505 = vpack.c.bf16 %v498, %v495
    %v510 = vunpack.c.l.b16 %v501
    %v511 = vunpack.c.l.b16 %v502
    %v512 = vunpack.c.l.b16 %v503
    %v513 = vunpack.c.l.b16 %v504
    %v514 = vpack.c.b16 %v511, %v510
    %v515 = vpack.c.b16 %v513, %v512
    %v519 = vsel %vm205, %v505, 0
    %521 = vmatprep.subr.bf16.mxu0 0
    %522 = vmatpush1.bf16.msra.mxu0 %v514
    %523 = vmatprep.subr.bf16.mxu0 0
    %524 = vmatpush1.bf16.msra.mxu0 %v515
    %525 = vmatprep.subr.bf16.mxu0 0
    %526 = vmatpush1.bf16.msra.mxu0 0
    %527 = vmatprep.subr.bf16.mxu0 0
    %528 = vmatpush1.bf16.msra.mxu0 0
    %529 = vmatprep.subr.bf16.mxu0 0
    %530 = vmatpush1.bf16.msra.mxu0 0
    %531 = vmatprep.subr.bf16.mxu0 0
    %532 = vmatpush1.bf16.msra.mxu0 0
    %533 = vmatprep.subr.bf16.mxu0 0
    %534 = vmatpush1.bf16.msra.mxu0 0
    %535 = vmatprep.subr.bf16.mxu0 0
    %536 = vmatpush1.bf16.msra.mxu0 0
    %537 = vmatprep.subr.bf16.mxu0 0
    %538 = vmatpush1.bf16.msra.mxu0 0
    %539 = vmatprep.subr.bf16.mxu0 0
    %540 = vmatpush1.bf16.msra.mxu0 0
    %541 = vmatprep.subr.bf16.mxu0 0
    %542 = vmatpush1.bf16.msra.mxu0 0
    %543 = vmatprep.subr.bf16.mxu0 0
    %544 = vmatpush1.bf16.msra.mxu0 0
    %545 = vmatprep.subr.bf16.mxu0 0
    %546 = vmatpush1.bf16.msra.mxu0 0
    %547 = vmatprep.subr.bf16.mxu0 0
    %548 = vmatpush1.bf16.msra.mxu0 0
    %549 = vmatprep.subr.bf16.mxu0 0
    %550 = vmatpush1.bf16.msra.mxu0 0
    %551 = vmatprep.subr.bf16.mxu0 0
    %552 = vmatpush1.bf16.msra.mxu0 0
    %553 = vmatprep.mubr.bf16.mxu0 0
    %554 = vmatmul.mubr.bf16.gmra.mrb[0].mxu0 %v519
    %v555 = vpop.f32.mrb[0].mxu0
    %v556 = vadd.f32 0.0, %v555
    %v557 = vpop.f32.mrb[0].mxu0
    %v558 = vpop.f32.mrb[0].mxu0
    %v559 = vadd.f32 0.0, %v558
    %v560 = vpop.f32.mrb[0].mxu0
    %561 = vdwg.mxu0
    %v562 = vadd.f32 %v433, %v556
    %v563 = vadd.f32 %v434, %v559
    %v564 = vld [vmem:[%s3] sm:$0x1]
    %v566 = vlaneseq
    %v567 = vshrl.u32 %v566, 7
    %v568 = vsub.s32 0, %v567
    %v569 = vrot.slane %v564, %v568
    %v571 = vadd.f32 %v562, %v569
    %v572 = vadd.f32 %v563, %v569
    %v573 = vmax.f32 %v571, 0.0
    %v574 = vmax.f32 %v572, 0.0
    %575 = vst [vmem:[#allocation7] sm:$0xff] %v573
    %576 = vst [vmem:[#allocation7 + $0x8] sm:$0xff] %v574
    // Predicated region
    $region26: #{tpu_custom_call.1} parent=1 // pred_check
      _
    $region27: #{tpu_custom_call.1} parent=1 // pred_check_branch
      %578 = sbr.rel (0) target = $region29
    $region28: #{tpu_custom_call.1} parent=1 // pred_region
      %s580 = ssub.s32 256, 256
      %581 = vsyncadd [#allocation4], %s580
      %s582 = sshll.u32 [#allocation7], 4
      %s583 = int_to_ptr.vmem [resolvable:$true] %s582
      %588 = dma.vmem_to_hbm [thread:$0]  %s583, 256, %s4, [#allocation4], 128, 128, 8
    $region29: #{tpu_custom_call.1} parent=1 // pred_fallthru
      _
    // Predicated region
    $region30: #{tpu_custom_call.1} parent=1 // pred_check
      _
    $region31: #{tpu_custom_call.1} parent=1 // pred_check_branch
      %590 = sbr.rel (0) target = $region33
    $region32: #{tpu_custom_call.1} parent=1 // pred_region
      %591 = dma.done [#allocation4], 256
    $region33: #{tpu_custom_call.1} parent=1 // pred_fallthru
      _
    %592 = vsyncpa [#allocation3], 1
    %593 = vsyncpa [#allocation6], 1
    %594 = vsyncpa [#allocation4], 1

</llo_original>
